<compile_context>
chip_gen: v7x
topology: tpu7x:2x2x1
jax: 0.10.0
libtpu: 0.0.40
codegen_flags: <defaults>
</compile_context>

<pallas_src>
import functools

import jax
import jax.numpy as jnp
from jax.experimental import pallas as pl
from jax.experimental.pallas import tpu as pltpu


_LANE = 128      # lane width (last dim)
_SUBLANE = 8     # sublane width (second-to-last dim)


def _round_up(n, m):
    return ((n + m - 1) // m) * m


# --------------------------------------------------------------------------
# Fused MLP kernel.
#   x_ref : bf16 [Bp, D0p]
#   w_ref : bf16 [L, Kmax, Nmax]   (pre-transposed [Din, Dout], zero-padded)
#   b_ref : f32  [L, 1,  Nmax]     (zero-padded)
#   o_ref : f32  [Bp, DLp]
# --------------------------------------------------------------------------
def _fused_mlp_kernel(x_ref, w_ref, b_ref, o_ref, *, layer_dims, relu_flags):
    num_layers = len(layer_dims)
    h = x_ref[...]                                       # bf16 activations
    for l in range(num_layers):
        din_p, dout_p = layer_dims[l]
        w = w_ref[l][:din_p, :dout_p]                    # bf16 [Kp, Np]
        b = b_ref[l][:, :dout_p]                         # f32  [1,  Np]
        y = jax.lax.dot_general(
            h, w,
            dimension_numbers=(((1,), (0,)), ((), ())),
            preferred_element_type=jnp.float32,          # f32 accumulate on MXU
        ) + b                                            # bias add in f32
        if relu_flags[l]:
            y = jnp.maximum(y, 0.0)                      # ReLU in f32
        if l == num_layers - 1:
            h = y                                        # final result stays f32
        else:
            h = y.astype(jnp.bfloat16)                   # carry activations in bf16
    o_ref[...] = h.astype(o_ref.dtype)


def _make_forward(num_classes, in_pad, out_pad, layer_dims, relu_flags,
                  resident_bytes):
    """Build a cached, jitted forward: pad -> single pallas_call -> slice."""
    kernel = functools.partial(_fused_mlp_kernel,
                               layer_dims=tuple(layer_dims),
                               relu_flags=tuple(relu_flags))
    vmem_spec = pl.BlockSpec(memory_space=pltpu.MemorySpace.VMEM)

    # VMEM guard: bump the scoped limit (with headroom) if the resident set is
    # larger than the conservative default.  Toy sizes never hit this.
    # TODO(synk): for very large hidden sizes / batches, switch to a batch-grid
    # (dimension_semantics=("parallel",)) with VMEM-resident weights instead of
    # the no-grid fully-resident design (needed for v7x's 64 MiB VMEM / 2 TCs).
    compiler_params = None
    if resident_bytes > (16 << 20):
        compiler_params = pltpu.CompilerParams(
            vmem_limit_bytes=int(min(resident_bytes * 2, 60 << 20)))

    def forward(x, w_packed, b_packed):
        B, Din = x.shape
        B_p = _round_up(B, _SUBLANE)
        # Pad directly into bf16 (halves activation DMA bytes; fused by XLA).
        xp = jnp.zeros((B_p, in_pad), jnp.bfloat16)
        xp = xp.at[:B, :Din].set(x.astype(jnp.bfloat16))
        yp = pl.pallas_call(
            kernel,
            out_shape=jax.ShapeDtypeStruct((B_p, out_pad), jnp.float32),
            in_specs=[vmem_spec, vmem_spec, vmem_spec],
            out_specs=vmem_spec,
            compiler_params=compiler_params,
        )(xp, w_packed, b_packed)
        return yp[:B, :num_classes]

    return jax.jit(forward)


# --------------------------------------------------------------------------
# Parameter init (PyTorch nn.Linear-style shapes and uniform init)
# --------------------------------------------------------------------------
def init_linear_params(key, in_features, out_features, dtype=jnp.float32):
    """weight: [out, in], bias: [out]; uniform(-1/sqrt(in), 1/sqrt(in))."""
    kw, kb = jax.random.split(key)
    bound = 1.0 / jnp.sqrt(jnp.array(in_features, dtype=jnp.float32))
    w = jax.random.uniform(kw, (out_features, in_features), dtype,
                           minval=-bound, maxval=bound)
    bias = jax.random.uniform(kb, (out_features,), dtype,
                              minval=-bound, maxval=bound)
    return w, bias


class LinearModelPallas:
    """Mirror of the PyTorch LinearModel forward pass, fused into one kernel."""

    def __init__(self, input_size, hidden_sizes, num_classes, key):
        self.input_size = input_size
        self.hidden_sizes = list(hidden_sizes)
        self.num_classes = num_classes

        # Layer plan: (din, dout, apply_relu) -- matches nn.ModuleList order.
        dims = []
        if self.hidden_sizes:
            dims.append((input_size, self.hidden_sizes[0], True))
            for i in range(1, len(self.hidden_sizes)):
                dims.append((self.hidden_sizes[i - 1], self.hidden_sizes[i], True))
            dims.append((self.hidden_sizes[-1], num_classes, False))
        else:
            dims.append((input_size, num_classes, False))

        self.relu_flags = [r for (_, _, r) in dims]
        self.logical_params = []   # (W[out,in] f32, b[out] f32) -- reference only

        layer_dims = [(_round_up(din, _LANE), _round_up(dout, _LANE))
                      for (din, dout, _) in dims]
        self.layer_dims = layer_dims
        k_max = max(d for (d, _) in layer_dims)
        n_max = max(d for (_, d) in layer_dims)
        num_layers = len(dims)

        # Coalesce all weights/biases into single packed, padded arrays so the
        # kernel sees 3 inputs (x, W, B) -> one big DMA instead of 2L small ones.
        w_packed = jnp.zeros((num_layers, k_max, n_max), jnp.bfloat16)
        b_packed = jnp.zeros((num_layers, 1, n_max), jnp.float32)

        keys = jax.random.split(key, num_layers)
        for l, (k, (din, dout, _)) in enumerate(zip(keys, dims)):
            w, b = init_linear_params(k, din, dout)
            self.logical_params.append((w, b))
            # Pre-transpose once (host-side) to [Din, Dout], zero-pad, cast bf16.
            w_packed = w_packed.at[l, :din, :dout].set(w.T.astype(jnp.bfloat16))
            b_packed = b_packed.at[l, 0, :dout].set(b)

        self.w_packed = w_packed
        self.b_packed = b_packed

        in_pad = layer_dims[0][0]
        out_pad = layer_dims[-1][1]
        resident_bytes = (w_packed.size * 2 + b_packed.size * 4
                          + _SUBLANE * in_pad * 2 + _SUBLANE * out_pad * 4)

        # Cache a single jitted forward (pad -> pallas_call -> slice).
        self._forward = _make_forward(num_classes, in_pad, out_pad,
                                      layer_dims, self.relu_flags,
                                      resident_bytes)

    def __call__(self, x):
        return self._forward(x, self.w_packed, self.b_packed)


def reference_forward(model, x):
    """Plain-JAX reference with identical numerics (bf16 MXU inputs, f32
    bias/ReLU, bf16 activations between layers)."""
    h = x.astype(jnp.bfloat16)
    num_layers = len(model.logical_params)
    for l, ((w, b), relu) in enumerate(zip(model.logical_params, model.relu_flags)):
        y = jax.lax.dot_general(
            h, w.T.astype(jnp.bfloat16),
            dimension_numbers=(((1,), (0,)), ((), ())),
            preferred_element_type=jnp.float32,
        ) + b
        if relu:
            y = jnp.maximum(y, 0.0)
        h = y if l == num_layers - 1 else y.astype(jnp.bfloat16)
    return h


if __name__ == "__main__":
    key = jax.random.PRNGKey(0)
    k_in, k_model = jax.random.split(key)

    batch = 8
    input_size = 32
    hidden_sizes = [64, 32]
    num_classes = 16

    x = jax.random.normal(k_in, (batch, input_size), dtype=jnp.float32)

    model = LinearModelPallas(input_size, hidden_sizes, num_classes, k_model)
    out = model(x)
    out = jax.block_until_ready(out)

    ref = reference_forward(model, x)
    assert out.shape == (batch, num_classes), out.shape
    assert jnp.allclose(out, ref, atol=1e-2, rtol=1e-2), "mismatch vs reference"

    print("KERNEL_OK")
</pallas_src>

<mosaic_0001>
module attributes {stable_mosaic.version = 11 : i64} {
  func.func @_fused_mlp_kernel(%arg0: memref<8x128xbf16, #tpu.memory_space<vmem>>, %arg1: memref<3x128x128xbf16, #tpu.memory_space<vmem>>, %arg2: memref<3x1x128xf32, #tpu.memory_space<vmem>>, %arg3: memref<8x128xf32, #tpu.memory_space<vmem>>) attributes {dimension_semantics = [], scalar_prefetch = 0 : i64, scratch_operands = 0 : i64, tpu.core_type = #tpu.core_type<tc>} {
    %c0 = arith.constant 0 : index
    %c0_0 = arith.constant 0 : index
    %0 = vector.load %arg0[%c0, %c0_0] : memref<8x128xbf16, #tpu.memory_space<vmem>>, vector<8x128xbf16>
    %c0_1 = arith.constant 0 : index
    %c0_2 = arith.constant 0 : index
    %c0_3 = arith.constant 0 : index
    %1 = vector.load %arg1[%c0_1, %c0_2, %c0_3] : memref<3x128x128xbf16, #tpu.memory_space<vmem>>, vector<1x128x128xbf16>
    %2 = vector.shape_cast %1 : vector<1x128x128xbf16> to vector<128x128xbf16>
    %c0_4 = arith.constant 0 : index
    %c0_5 = arith.constant 0 : index
    %c0_6 = arith.constant 0 : index
    %3 = vector.load %arg2[%c0_4, %c0_5, %c0_6] : memref<3x1x128xf32, #tpu.memory_space<vmem>>, vector<1x1x128xf32>
    %4 = vector.shape_cast %3 : vector<1x1x128xf32> to vector<1x128xf32>
    %cst = arith.constant dense<0.000000e+00> : vector<8x128xf32>
    %5 = tpu.matmul %0, %2, %cst {dimension_numbers = #tpu.dot_dimension_numbers<[1], [0], [0], [1], [0, 0, 1, 1], [], []>} : vector<8x128xbf16>, vector<128x128xbf16>, vector<8x128xf32> -> vector<8x128xf32>
    %6 = vector.broadcast %4 : vector<1x128xf32> to vector<8x128xf32>
    %7 = arith.addf %5, %6 : vector<8x128xf32>
    %cst_7 = arith.constant 0.000000e+00 : f32
    %8 = vector.broadcast %cst_7 : f32 to vector<8x128xf32>
    %9 = arith.maximumf %7, %8 : vector<8x128xf32>
    %10 = arith.truncf %9 : vector<8x128xf32> to vector<8x128xbf16>
    %c1 = arith.constant 1 : index
    %c0_8 = arith.constant 0 : index
    %c0_9 = arith.constant 0 : index
    %11 = vector.load %arg1[%c1, %c0_8, %c0_9] : memref<3x128x128xbf16, #tpu.memory_space<vmem>>, vector<1x128x128xbf16>
    %12 = vector.shape_cast %11 : vector<1x128x128xbf16> to vector<128x128xbf16>
    %c1_10 = arith.constant 1 : index
    %c0_11 = arith.constant 0 : index
    %c0_12 = arith.constant 0 : index
    %13 = vector.load %arg2[%c1_10, %c0_11, %c0_12] : memref<3x1x128xf32, #tpu.memory_space<vmem>>, vector<1x1x128xf32>
    %14 = vector.shape_cast %13 : vector<1x1x128xf32> to vector<1x128xf32>
    %cst_13 = arith.constant dense<0.000000e+00> : vector<8x128xf32>
    %15 = tpu.matmul %10, %12, %cst_13 {dimension_numbers = #tpu.dot_dimension_numbers<[1], [0], [0], [1], [0, 0, 1, 1], [], []>} : vector<8x128xbf16>, vector<128x128xbf16>, vector<8x128xf32> -> vector<8x128xf32>
    %16 = vector.broadcast %14 : vector<1x128xf32> to vector<8x128xf32>
    %17 = arith.addf %15, %16 : vector<8x128xf32>
    %cst_14 = arith.constant 0.000000e+00 : f32
    %18 = vector.broadcast %cst_14 : f32 to vector<8x128xf32>
    %19 = arith.maximumf %17, %18 : vector<8x128xf32>
    %20 = arith.truncf %19 : vector<8x128xf32> to vector<8x128xbf16>
    %c2 = arith.constant 2 : index
    %c0_15 = arith.constant 0 : index
    %c0_16 = arith.constant 0 : index
    %21 = vector.load %arg1[%c2, %c0_15, %c0_16] : memref<3x128x128xbf16, #tpu.memory_space<vmem>>, vector<1x128x128xbf16>
    %22 = vector.shape_cast %21 : vector<1x128x128xbf16> to vector<128x128xbf16>
    %c2_17 = arith.constant 2 : index
    %c0_18 = arith.constant 0 : index
    %c0_19 = arith.constant 0 : index
    %23 = vector.load %arg2[%c2_17, %c0_18, %c0_19] : memref<3x1x128xf32, #tpu.memory_space<vmem>>, vector<1x1x128xf32>
    %24 = vector.shape_cast %23 : vector<1x1x128xf32> to vector<1x128xf32>
    %cst_20 = arith.constant dense<0.000000e+00> : vector<8x128xf32>
    %25 = tpu.matmul %20, %22, %cst_20 {dimension_numbers = #tpu.dot_dimension_numbers<[1], [0], [0], [1], [0, 0, 1, 1], [], []>} : vector<8x128xbf16>, vector<128x128xbf16>, vector<8x128xf32> -> vector<8x128xf32>
    %26 = vector.broadcast %24 : vector<1x128xf32> to vector<8x128xf32>
    %27 = arith.addf %25, %26 : vector<8x128xf32>
    %c0_21 = arith.constant 0 : index
    %c0_22 = arith.constant 0 : index
    %28 = vector.load %arg3[%c0_21, %c0_22] : memref<8x128xf32, #tpu.memory_space<vmem>>, vector<8x128xf32>
    tpu.vector_store %arg3[%c0_21, %c0_22], %27 {strides = array<i32>} : memref<8x128xf32, #tpu.memory_space<vmem>>, vector<8x128xf32>,
    return
  }
}

</mosaic_0001>

<llo_original>
// kernel: forward.1
$region0: #{forward.1}
  #allocation0 [shape = 'u32[]', space=smem, size = 0x4, offset = 0x4, fixed_abs, tag = 'smem constant byte address 0x4 - core index']
  #allocation1 [shape = 'u32[144,128]{1,0:T(1,128)}', space=vmem, size = 0x12000, scoped, tag = 'internal scratch']
  %s0 = inlined_call_operand.vmem [shape: bf16[8,128], index: 0, kind: input, shape index: {}]
  %s1 = inlined_call_operand.hbm [shape: bf16[3,128,128], index: 1, kind: input, shape index: {}]
  %s2 = inlined_call_operand.vmem [shape: f32[3,1,128], index: 2, kind: input, shape index: {}]
  %s3 = inlined_call_operand.hbm [shape: f32[8,128], index: 3, kind: output, shape index: {}]
  %s4 = sld [smem:[#allocation0]]
  $region26: #{forward.1} parent=0
    _
  %s6 = ssub.s32 1, %s4
  %s7 = scalar_select 0, %s6, %s4
  $region1: #{forward.1} parent=0
    #allocation2 [shape = 'u8[98304]{0}', space=vmem, size = 0x18000, scoped, tag = 'input window, operand 1, single buffered']
    #allocation3 [shape = 's32[1]{0}', space=sflag, size = 0x4, scoped, tag = 'scoped memory for forward.1']
    #allocation4 [shape = 's32[1]{0}', space=sflag, size = 0x4, scoped, tag = 'scoped memory for forward.1']
    #allocation5 [shape = 'u8[4096]{0}', space=vmem, size = 0x1000, scoped, tag = 'output window, operand 0, single buffered']
    %8 = vsyncpa [#allocation3], 0
    %9 = vsyncpa [#allocation4], 0
    // Predicated region
    $region2: #{forward.1} parent=1 // pred_check
      _
    $region3: #{forward.1} parent=1 // pred_check_branch
      %11 = sbr.rel (0) target = $region5
    $region4: #{forward.1} parent=1 // pred_region
      _
    $region5: #{forward.1} parent=1 // pred_fallthru
      _
    // Predicated region
    $region6: #{forward.1} parent=1 // pred_check
      _
    $region7: #{forward.1} parent=1 // pred_check_branch
      %13 = sbr.rel (0) target = $region9
    $region8: #{forward.1} parent=1 // pred_region
      %s15 = ssub.s32 3072, 3072
      %16 = vsyncadd [#allocation3], %s15
      %s17 = sshll.u32 [#allocation2], 4
      %s18 = int_to_ptr.vmem [resolvable:$true] %s17
      %23 = dma.hbm_to_vmem [thread:$0]  %s1, 3072, %s18, [#allocation3], 64, 64, 4
    $region9: #{forward.1} parent=1 // pred_fallthru
      _
    // Predicated region
    $region10: #{forward.1} parent=1 // pred_check
      _
    $region11: #{forward.1} parent=1 // pred_check_branch
      %25 = sbr.rel (0) target = $region13
    $region12: #{forward.1} parent=1 // pred_region
      _
    $region13: #{forward.1} parent=1 // pred_fallthru
      _
    // Predicated region
    $region14: #{forward.1} parent=1 // pred_check
      _
    $region15: #{forward.1} parent=1 // pred_check_branch
      %27 = sbr.rel (0) target = $region17
    $region16: #{forward.1} parent=1 // pred_region
      %28 = dma.done [#allocation3], 3072
    $region17: #{forward.1} parent=1 // pred_fallthru
      _
    %v30 = vld [vmem:[%s0] sm:$0xf]
    %v31 = vld [vmem:[#allocation2] sm:$0xf]
    %v32 = vld [vmem:[#allocation2 + $0x4] sm:$0xf]
    %v33 = vld [vmem:[#allocation2 + $0x8] sm:$0xf]
    %v34 = vld [vmem:[#allocation2 + $0xc] sm:$0xf]
    %v35 = vld [vmem:[#allocation2 + $0x10] sm:$0xf]
    %v36 = vld [vmem:[#allocation2 + $0x14] sm:$0xf]
    %v37 = vld [vmem:[#allocation2 + $0x18] sm:$0xf]
    %v38 = vld [vmem:[#allocation2 + $0x1c] sm:$0xf]
    %v39 = vld [vmem:[#allocation2 + $0x20] sm:$0xf]
    %v40 = vld [vmem:[#allocation2 + $0x24] sm:$0xf]
    %v41 = vld [vmem:[#allocation2 + $0x28] sm:$0xf]
    %v42 = vld [vmem:[#allocation2 + $0x2c] sm:$0xf]
    %v43 = vld [vmem:[#allocation2 + $0x30] sm:$0xf]
    %v44 = vld [vmem:[#allocation2 + $0x34] sm:$0xf]
    %v45 = vld [vmem:[#allocation2 + $0x38] sm:$0xf]
    %v46 = vld [vmem:[#allocation2 + $0x3c] sm:$0xf]
    %v47 = vld [vmem:[%s2] sm:$0x1]
    %v49 = vlaneseq
    %v50 = vshrl.u32 %v49, 7
    %v51 = vsub.s32 0, %v50
    %v52 = vrot.slane %v47, %v51
    %v70 = vunpack.c.l.b16 %v31
    %v71 = vunpack.c.l.b16 %v32
    %v72 = vunpack.c.l.b16 %v33
    %v73 = vunpack.c.l.b16 %v34
    %v74 = vunpack.c.l.b16 %v35
    %v75 = vunpack.c.l.b16 %v36
    %v76 = vunpack.c.l.b16 %v37
    %v77 = vunpack.c.l.b16 %v38
    %v78 = vunpack.c.l.b16 %v39
    %v79 = vunpack.c.l.b16 %v40
    %v80 = vunpack.c.l.b16 %v41
    %v81 = vunpack.c.l.b16 %v42
    %v82 = vunpack.c.l.b16 %v43
    %v83 = vunpack.c.l.b16 %v44
    %v84 = vunpack.c.l.b16 %v45
    %v85 = vunpack.c.l.b16 %v46
    %v86 = vpack.c.b16 %v71, %v70
    %v87 = vpack.c.b16 %v73, %v72
    %v88 = vpack.c.b16 %v75, %v74
    %v89 = vpack.c.b16 %v77, %v76
    %v90 = vpack.c.b16 %v79, %v78
    %v91 = vpack.c.b16 %v81, %v80
    %v92 = vpack.c.b16 %v83, %v82
    %v93 = vpack.c.b16 %v85, %v84
    %102 = vmatprep.subr.bf16.mxu0 0
    %103 = vmatpush1.bf16.msra.mxu0 %v86
    %104 = vmatprep.subr.bf16.mxu0 0
    %105 = vmatpush1.bf16.msra.mxu0 %v87
    %106 = vmatprep.subr.bf16.mxu0 0
    %107 = vmatpush1.bf16.msra.mxu0 %v88
    %108 = vmatprep.subr.bf16.mxu0 0
    %109 = vmatpush1.bf16.msra.mxu0 %v89
    %110 = vmatprep.subr.bf16.mxu0 0
    %111 = vmatpush1.bf16.msra.mxu0 %v90
    %112 = vmatprep.subr.bf16.mxu0 0
    %113 = vmatpush1.bf16.msra.mxu0 %v91
    %114 = vmatprep.subr.bf16.mxu0 0
    %115 = vmatpush1.bf16.msra.mxu0 %v92
    %116 = vmatprep.subr.bf16.mxu0 0
    %117 = vmatpush1.bf16.msra.mxu0 %v93
    %118 = vmatprep.subr.bf16.mxu0 0
    %119 = vmatpush1.bf16.msra.mxu0 0
    %120 = vmatprep.subr.bf16.mxu0 0
    %121 = vmatpush1.bf16.msra.mxu0 0
    %122 = vmatprep.subr.bf16.mxu0 0
    %123 = vmatpush1.bf16.msra.mxu0 0
    %124 = vmatprep.subr.bf16.mxu0 0
    %125 = vmatpush1.bf16.msra.mxu0 0
    %126 = vmatprep.subr.bf16.mxu0 0
    %127 = vmatpush1.bf16.msra.mxu0 0
    %128 = vmatprep.subr.bf16.mxu0 0
    %129 = vmatpush1.bf16.msra.mxu0 0
    %130 = vmatprep.subr.bf16.mxu0 0
    %131 = vmatpush1.bf16.msra.mxu0 0
    %132 = vmatprep.subr.bf16.mxu0 0
    %133 = vmatpush1.bf16.msra.mxu0 0
    %134 = vmatprep.mubr.bf16.mxu0 0
    %135 = vmatmul.mubr.bf16.gmra.mrb[0].mxu0 %v30
    %v136 = vpop.f32.mrb[0].mxu0
    %v137 = vadd.f32 %v52, %v136
    %v138 = vpop.f32.mrb[0].mxu0
    %v139 = vpop.f32.mrb[0].mxu0
    %v140 = vpop.f32.mrb[0].mxu0
    %141 = vdwg.mxu0
    %v142 = vmax.f32 %v137, 0.0
    %v143 = vpack.c.bf16 %v142, %v142
    %s144 = scalar_lea.vmem [#allocation2], 64
    %v145 = vld [vmem:[%s144] sm:$0xf]
    %v146 = vld [vmem:[%s144 + $0x4] sm:$0xf]
    %v147 = vld [vmem:[%s144 + $0x8] sm:$0xf]
    %v148 = vld [vmem:[%s144 + $0xc] sm:$0xf]
    %v149 = vld [vmem:[%s144 + $0x10] sm:$0xf]
    %v150 = vld [vmem:[%s144 + $0x14] sm:$0xf]
    %v151 = vld [vmem:[%s144 + $0x18] sm:$0xf]
    %v152 = vld [vmem:[%s144 + $0x1c] sm:$0xf]
    %v153 = vld [vmem:[%s144 + $0x20] sm:$0xf]
    %v154 = vld [vmem:[%s144 + $0x24] sm:$0xf]
    %v155 = vld [vmem:[%s144 + $0x28] sm:$0xf]
    %v156 = vld [vmem:[%s144 + $0x2c] sm:$0xf]
    %v157 = vld [vmem:[%s144 + $0x30] sm:$0xf]
    %v158 = vld [vmem:[%s144 + $0x34] sm:$0xf]
    %v159 = vld [vmem:[%s144 + $0x38] sm:$0xf]
    %v160 = vld [vmem:[%s144 + $0x3c] sm:$0xf]
    %s161 = scalar_lea.vmem %s2, 1
    %v162 = vld [vmem:[%s161] sm:$0x1]
    %v164 = vlaneseq
    %v165 = vshrl.u32 %v164, 7
    %v166 = vsub.s32 0, %v165
    %v167 = vrot.slane %v162, %v166
    %v185 = vunpack.c.l.b16 %v145
    %v186 = vunpack.c.l.b16 %v146
    %v187 = vunpack.c.l.b16 %v147
    %v188 = vunpack.c.l.b16 %v148
    %v189 = vunpack.c.l.b16 %v149
    %v190 = vunpack.c.l.b16 %v150
    %v191 = vunpack.c.l.b16 %v151
    %v192 = vunpack.c.l.b16 %v152
    %v193 = vunpack.c.l.b16 %v153
    %v194 = vunpack.c.l.b16 %v154
    %v195 = vunpack.c.l.b16 %v155
    %v196 = vunpack.c.l.b16 %v156
    %v197 = vunpack.c.l.b16 %v157
    %v198 = vunpack.c.l.b16 %v158
    %v199 = vunpack.c.l.b16 %v159
    %v200 = vunpack.c.l.b16 %v160
    %v201 = vpack.c.b16 %v186, %v185
    %v202 = vpack.c.b16 %v188, %v187
    %v203 = vpack.c.b16 %v190, %v189
    %v204 = vpack.c.b16 %v192, %v191
    %v205 = vpack.c.b16 %v194, %v193
    %v206 = vpack.c.b16 %v196, %v195
    %v207 = vpack.c.b16 %v198, %v197
    %v208 = vpack.c.b16 %v200, %v199
    %217 = vmatprep.subr.bf16.mxu0 0
    %218 = vmatpush1.bf16.msra.mxu0 %v201
    %219 = vmatprep.subr.bf16.mxu0 0
    %220 = vmatpush1.bf16.msra.mxu0 %v202
    %221 = vmatprep.subr.bf16.mxu0 0
    %222 = vmatpush1.bf16.msra.mxu0 %v203
    %223 = vmatprep.subr.bf16.mxu0 0
    %224 = vmatpush1.bf16.msra.mxu0 %v204
    %225 = vmatprep.subr.bf16.mxu0 0
    %226 = vmatpush1.bf16.msra.mxu0 %v205
    %227 = vmatprep.subr.bf16.mxu0 0
    %228 = vmatpush1.bf16.msra.mxu0 %v206
    %229 = vmatprep.subr.bf16.mxu0 0
    %230 = vmatpush1.bf16.msra.mxu0 %v207
    %231 = vmatprep.subr.bf16.mxu0 0
    %232 = vmatpush1.bf16.msra.mxu0 %v208
    %233 = vmatprep.subr.bf16.mxu0 0
    %234 = vmatpush1.bf16.msra.mxu0 0
    %235 = vmatprep.subr.bf16.mxu0 0
    %236 = vmatpush1.bf16.msra.mxu0 0
    %237 = vmatprep.subr.bf16.mxu0 0
    %238 = vmatpush1.bf16.msra.mxu0 0
    %239 = vmatprep.subr.bf16.mxu0 0
    %240 = vmatpush1.bf16.msra.mxu0 0
    %241 = vmatprep.subr.bf16.mxu0 0
    %242 = vmatpush1.bf16.msra.mxu0 0
    %243 = vmatprep.subr.bf16.mxu0 0
    %244 = vmatpush1.bf16.msra.mxu0 0
    %245 = vmatprep.subr.bf16.mxu0 0
    %246 = vmatpush1.bf16.msra.mxu0 0
    %247 = vmatprep.subr.bf16.mxu0 0
    %248 = vmatpush1.bf16.msra.mxu0 0
    %249 = vmatprep.mubr.bf16.mxu0 0
    %250 = vmatmul.mubr.bf16.gmra.mrb[0].mxu0 %v143
    %v251 = vpop.f32.mrb[0].mxu0
    %v252 = vadd.f32 %v167, %v251
    %v253 = vpop.f32.mrb[0].mxu0
    %v254 = vpop.f32.mrb[0].mxu0
    %v255 = vpop.f32.mrb[0].mxu0
    %256 = vdwg.mxu0
    %v257 = vmax.f32 %v252, 0.0
    %v258 = vpack.c.bf16 %v257, %v257
    %s259 = scalar_lea.vmem [#allocation2], 128
    %v260 = vld [vmem:[%s259] sm:$0xf]
    %v261 = vld [vmem:[%s259 + $0x4] sm:$0xf]
    %v262 = vld [vmem:[%s259 + $0x8] sm:$0xf]
    %v263 = vld [vmem:[%s259 + $0xc] sm:$0xf]
    %v264 = vld [vmem:[%s259 + $0x10] sm:$0xf]
    %v265 = vld [vmem:[%s259 + $0x14] sm:$0xf]
    %v266 = vld [vmem:[%s259 + $0x18] sm:$0xf]
    %v267 = vld [vmem:[%s259 + $0x1c] sm:$0xf]
    %v268 = vld [vmem:[%s259 + $0x20] sm:$0xf]
    %v269 = vld [vmem:[%s259 + $0x24] sm:$0xf]
    %v270 = vld [vmem:[%s259 + $0x28] sm:$0xf]
    %v271 = vld [vmem:[%s259 + $0x2c] sm:$0xf]
    %v272 = vld [vmem:[%s259 + $0x30] sm:$0xf]
    %v273 = vld [vmem:[%s259 + $0x34] sm:$0xf]
    %v274 = vld [vmem:[%s259 + $0x38] sm:$0xf]
    %v275 = vld [vmem:[%s259 + $0x3c] sm:$0xf]
    %s276 = scalar_lea.vmem %s2, 2
    %v277 = vld [vmem:[%s276] sm:$0x1]
    %v279 = vlaneseq
    %v280 = vshrl.u32 %v279, 7
    %v281 = vsub.s32 0, %v280
    %v282 = vrot.slane %v277, %v281
    %v300 = vunpack.c.l.b16 %v260
    %v301 = vunpack.c.l.b16 %v261
    %v302 = vunpack.c.l.b16 %v262
    %v303 = vunpack.c.l.b16 %v263
    %v304 = vunpack.c.l.b16 %v264
    %v305 = vunpack.c.l.b16 %v265
    %v306 = vunpack.c.l.b16 %v266
    %v307 = vunpack.c.l.b16 %v267
    %v308 = vunpack.c.l.b16 %v268
    %v309 = vunpack.c.l.b16 %v269
    %v310 = vunpack.c.l.b16 %v270
    %v311 = vunpack.c.l.b16 %v271
    %v312 = vunpack.c.l.b16 %v272
    %v313 = vunpack.c.l.b16 %v273
    %v314 = vunpack.c.l.b16 %v274
    %v315 = vunpack.c.l.b16 %v275
    %v316 = vpack.c.b16 %v301, %v300
    %v317 = vpack.c.b16 %v303, %v302
    %v318 = vpack.c.b16 %v305, %v304
    %v319 = vpack.c.b16 %v307, %v306
    %v320 = vpack.c.b16 %v309, %v308
    %v321 = vpack.c.b16 %v311, %v310
    %v322 = vpack.c.b16 %v313, %v312
    %v323 = vpack.c.b16 %v315, %v314
    %332 = vmatprep.subr.bf16.mxu0 0
    %333 = vmatpush1.bf16.msra.mxu0 %v316
    %334 = vmatprep.subr.bf16.mxu0 0
    %335 = vmatpush1.bf16.msra.mxu0 %v317
    %336 = vmatprep.subr.bf16.mxu0 0
    %337 = vmatpush1.bf16.msra.mxu0 %v318
    %338 = vmatprep.subr.bf16.mxu0 0
    %339 = vmatpush1.bf16.msra.mxu0 %v319
    %340 = vmatprep.subr.bf16.mxu0 0
    %341 = vmatpush1.bf16.msra.mxu0 %v320
    %342 = vmatprep.subr.bf16.mxu0 0
    %343 = vmatpush1.bf16.msra.mxu0 %v321
    %344 = vmatprep.subr.bf16.mxu0 0
    %345 = vmatpush1.bf16.msra.mxu0 %v322
    %346 = vmatprep.subr.bf16.mxu0 0
    %347 = vmatpush1.bf16.msra.mxu0 %v323
    %348 = vmatprep.subr.bf16.mxu0 0
    %349 = vmatpush1.bf16.msra.mxu0 0
    %350 = vmatprep.subr.bf16.mxu0 0
    %351 = vmatpush1.bf16.msra.mxu0 0
    %352 = vmatprep.subr.bf16.mxu0 0
    %353 = vmatpush1.bf16.msra.mxu0 0
    %354 = vmatprep.subr.bf16.mxu0 0
    %355 = vmatpush1.bf16.msra.mxu0 0
    %356 = vmatprep.subr.bf16.mxu0 0
    %357 = vmatpush1.bf16.msra.mxu0 0
    %358 = vmatprep.subr.bf16.mxu0 0
    %359 = vmatpush1.bf16.msra.mxu0 0
    %360 = vmatprep.subr.bf16.mxu0 0
    %361 = vmatpush1.bf16.msra.mxu0 0
    %362 = vmatprep.subr.bf16.mxu0 0
    %363 = vmatpush1.bf16.msra.mxu0 0
    %364 = vmatprep.mubr.bf16.mxu0 0
    %365 = vmatmul.mubr.bf16.gmra.mrb[0].mxu0 %v258
    %v366 = vpop.f32.mrb[0].mxu0
    %v367 = vadd.f32 %v282, %v366
    %v368 = vpop.f32.mrb[0].mxu0
    %v369 = vpop.f32.mrb[0].mxu0
    %v370 = vpop.f32.mrb[0].mxu0
    %371 = vdwg.mxu0
    %372 = vst [vmem:[#allocation5] sm:$0xff] %v367
    // Predicated region
    $region18: #{forward.1} parent=1 // pred_check
      _
    $region19: #{forward.1} parent=1 // pred_check_branch
      %374 = sbr.rel (0) target = $region21
    $region20: #{forward.1} parent=1 // pred_region
      %s376 = ssub.s32 128, 128
      %377 = vsyncadd [#allocation4], %s376
      %s379 = sshll.u32 [#allocation5], 4
      %s380 = int_to_ptr.vmem [resolvable:$true] %s379
      %382 = dma.vmem_to_hbm [thread:$0]  %s380, 128, %s3, [#allocation4]
    $region21: #{forward.1} parent=1 // pred_fallthru
      _
    // Predicated region
    $region22: #{forward.1} parent=1 // pred_check
      _
    $region23: #{forward.1} parent=1 // pred_check_branch
      %384 = sbr.rel (0) target = $region25
    $region24: #{forward.1} parent=1 // pred_region
      %385 = dma.done [#allocation4], 128
    $region25: #{forward.1} parent=1 // pred_fallthru
      _
    %386 = vsyncpa [#allocation3], 1
    %387 = vsyncpa [#allocation4], 1

</llo_original>
